<compile_context>
chip_gen: v5e
topology: v5e:2x2
jax: 0.10.0
libtpu: 0.0.40
codegen_flags: <defaults>
</compile_context>

<pallas_src>
import math
import functools

import jax
import jax.numpy as jnp
from jax.experimental import pallas as pl
from jax.experimental.pallas import tpu as pltpu


# --------------------------------------------------------------------------- #
# Kernel: fused im2col-matmul + InstanceNorm2d(affine) + LeakyReLU(0.01)
# --------------------------------------------------------------------------- #
def _convblock_kernel(p_ref, w_ref, gb_ref, out_ref,
                      conv_ref, sum_ref, sumsq_ref, *, hw, eps, slope):
    """grid = (N, 2, M): n = sample, phase in {0: conv+stats, 1: normalize},
    m = spatial tile over H*W.

    p_ref    : (1, TM, K)         bf16 im2col patch tile
    w_ref    : (K, Cp)            bf16 conv weight matrix (Cp = padded Cout)
    gb_ref   : (2, Cp)            f32 [gamma; beta]
    out_ref  : (1, TM, Cp)        output tile
    conv_ref : (M, TM, Cp)        f32 scratch: whole-sample conv result
    sum_ref  : (1, Cp)            f32 scratch: per-channel running sum
    sumsq_ref: (1, Cp)            f32 scratch: per-channel running sum of sq.
    """
    phase = pl.program_id(1)
    m = pl.program_id(2)

    # Reset the per-sample statistics at the start of each sample.
    @pl.when(jnp.logical_and(phase == 0, m == 0))
    def _():
        sum_ref[...] = jnp.zeros_like(sum_ref)
        sumsq_ref[...] = jnp.zeros_like(sumsq_ref)

    # Phase 0: conv tile (single MXU matmul, f32 accumulation) + stats.
    @pl.when(phase == 0)
    def _():
        acc = jnp.dot(p_ref[0], w_ref[...], preferred_element_type=jnp.float32)
        conv_ref[m] = acc
        sum_ref[...] += jnp.sum(acc, axis=0, keepdims=True)
        sumsq_ref[...] += jnp.sum(acc * acc, axis=0, keepdims=True)

    # Phase 1: finalize stats, fused affine + LeakyReLU, lane-dense store.
    # NOTE: single-pass variance (E[x^2]-mean^2) in f32 with a clamp; matches
    # PyTorch within the bf16-matmul tolerance used below.
    @pl.when(phase == 1)
    def _():
        inv_hw = 1.0 / hw
        mean = sum_ref[...] * inv_hw
        var = jnp.maximum(sumsq_ref[...] * inv_hw - mean * mean, 0.0)
        scale = jax.lax.rsqrt(var + eps) * gb_ref[0:1, :]        # gamma/std
        bias = gb_ref[1:2, :] - mean * scale                     # beta - mean*scale
        y = conv_ref[m] * scale + bias
        out_ref[0] = jnp.maximum(y, slope * y).astype(out_ref.dtype)


# --------------------------------------------------------------------------- #
# Tile selection: largest multiple-of-8 divisor of H*W under a VMEM budget
# --------------------------------------------------------------------------- #
def _pick_tile_m(hw, k_dim, cout_pad, max_rows=2048,
                 stream_budget_bytes=12 * 1024 * 1024):
    # bytes streamed per row: double-buffered bf16 patches + double-buffered
    # f32 output tiles.
    per_row = 2 * (k_dim * 2) + 2 * (cout_pad * 4)
    cap = max(8, min(max_rows, stream_budget_bytes // per_row))
    best = None
    for cand in range(8, min(hw, cap) + 1, 8):
        if hw % cand == 0:
            best = cand
    return best if best is not None else hw   # fall back: single full-dim tile


# --------------------------------------------------------------------------- #
# NHWC wrapper (preferred between chained blocks: no transposes)
# --------------------------------------------------------------------------- #
def conv_block_nhwc(x_nhwc, params, *, compute_dtype=jnp.bfloat16,
                    out_dtype=jnp.float32, tile_m=None, interpret=False):
    w, gamma, beta = params["w"], params["gamma"], params["beta"]
    Cout, Cin, KH, KW = w.shape
    assert (KH, KW) == (3, 3)
    N, H, W, Cin_x = x_nhwc.shape
    assert Cin_x == Cin
    HW = H * W
    K = 9 * Cin

    # Lane-dense output channels: round Cout up to a multiple of 128 so the
    # kernel stores full-lane vst (masked partial stores with small Cout were
    # the biggest measured store-path penalty).  Pad is sliced off below.
    Cout_pad = ((Cout + 127) // 128) * 128

    # ---- wrapper-side layout glue (no arithmetic) --------------------------
    # Cast EARLY: the 9x-expanded im2col intermediate is built in bf16.
    x = x_nhwc.astype(compute_dtype)
    xp = jnp.pad(x, ((0, 0), (1, 1), (1, 1), (0, 0)))
    cols = [xp[:, dy:dy + H, dx:dx + W, :] for dy in range(3) for dx in range(3)]
    patches = jnp.concatenate(cols, axis=-1).reshape(N, HW, K)

    # PyTorch weight (Cout, Cin, 3, 3) -> (3, 3, Cin, Cout) -> (K, Cout_pad),
    # same (dy, dx, c) tap ordering as the patches.
    w_mat = jnp.transpose(w, (2, 3, 1, 0)).reshape(K, Cout)
    w_mat = jnp.pad(w_mat, ((0, 0), (0, Cout_pad - Cout))).astype(compute_dtype)

    gb = jnp.stack([
        jnp.pad(gamma.astype(jnp.float32), (0, Cout_pad - Cout)),
        jnp.pad(beta.astype(jnp.float32), (0, Cout_pad - Cout)),
    ])                                                     # (2, Cout_pad)

    # ---- tiling & VMEM budget ----------------------------------------------
    TM = tile_m if tile_m is not None else _pick_tile_m(HW, K, Cout_pad)
    assert HW % TM == 0, f"tile_m={TM} must divide H*W={HW}"
    M = HW // TM

    in_sz = jnp.dtype(compute_dtype).itemsize
    out_sz = jnp.dtype(out_dtype).itemsize
    vmem_est = (2 * TM * K * in_sz               # double-buffered patch tiles
                + K * Cout_pad * in_sz           # weights (grid-invariant)
                + 2 * Cout_pad * 4               # gamma/beta
                + M * TM * Cout_pad * 4          # whole-sample f32 conv scratch
                + 2 * TM * Cout_pad * out_sz     # double-buffered output tiles
                + 8 * Cout_pad * 4)              # stats scratch (padded)
    # Explicit limit: generous headroom, capped at v7x's 64 MiB physical VMEM.
    vmem_limit = int(min(max(2 * vmem_est, 32 * 1024 * 1024), 64 * 1024 * 1024))

    kernel = functools.partial(_convblock_kernel, hw=HW, eps=1e-5, slope=0.01)

    out_flat = pl.pallas_call(
        kernel,
        out_shape=jax.ShapeDtypeStruct((N, HW, Cout_pad), out_dtype),
        grid_spec=pltpu.PrefetchScalarGridSpec(
            num_scalar_prefetch=0,
            grid=(N, 2, M),
            in_specs=[
                # Patches: streamed tile-by-tile in phase 0; parked on the last
                # tile in phase 1 so no block is re-fetched.
                pl.BlockSpec((1, TM, K),
                             lambda n, p, m: (n, m * (1 - p) + (M - 1) * p, 0)),
                pl.BlockSpec((K, Cout_pad), lambda n, p, m: (0, 0)),
                pl.BlockSpec((2, Cout_pad), lambda n, p, m: (0, 0)),
            ],
            out_specs=pl.BlockSpec(
                # Parked on block (n, 0) during phase 0 (not written there);
                # walks tiles during phase 1 -> each HBM block written once.
                (1, TM, Cout_pad), lambda n, p, m: (n, p * m, 0)),
            scratch_shapes=[
                pltpu.VMEM((M, TM, Cout_pad), jnp.float32),   # conv result
                pltpu.VMEM((1, Cout_pad), jnp.float32),       # sum
                pltpu.VMEM((1, Cout_pad), jnp.float32),       # sum of squares
            ]),
        compiler_params=pltpu.CompilerParams(
            dimension_semantics=("parallel", "arbitrary", "arbitrary"),
            vmem_limit_bytes=vmem_limit),
        interpret=interpret,
    )(patches, w_mat, gb)

    return out_flat[..., :Cout].reshape(N, H, W, Cout)


# --------------------------------------------------------------------------- #
# NCHW wrapper (PyTorch layout at model boundaries only)
# --------------------------------------------------------------------------- #
def conv_block(x_nchw, params, **kwargs):
    # Chained ConvBlocks should stay NHWC (call conv_block_nhwc directly) to
    # avoid a full-array HBM transpose pair per block.
    x = jnp.transpose(x_nchw, (0, 2, 3, 1))
    y = conv_block_nhwc(x, params, **kwargs)
    return jnp.transpose(y, (0, 3, 1, 2))


# --------------------------------------------------------------------------- #
# Deterministic parameter init (mirrors ConvBlock._init_layer_weights)
# --------------------------------------------------------------------------- #
def init_convblock_params(key, in_dim, out_dim):
    # kaiming_normal_(a=0.01, nonlinearity='leaky_relu'), fan_in = in_dim*3*3
    fan_in = in_dim * 9
    gain = math.sqrt(2.0 / (1.0 + 0.01 ** 2))
    std = gain / math.sqrt(fan_in)
    w = jax.random.normal(key, (out_dim, in_dim, 3, 3), jnp.float32) * std
    return {
        "w": w,
        "gamma": jnp.ones((out_dim,), jnp.float32),   # InstanceNorm affine init
        "beta": jnp.zeros((out_dim,), jnp.float32),
    }


# --------------------------------------------------------------------------- #
# Pure-JAX f32 reference (correctness check only)
# --------------------------------------------------------------------------- #
def conv_block_reference(x_nchw, params):
    w, gamma, beta = params["w"], params["gamma"], params["beta"]
    y = jax.lax.conv_general_dilated(
        x_nchw, w, window_strides=(1, 1), padding=((1, 1), (1, 1)),
        dimension_numbers=("NCHW", "OIHW", "NCHW"))
    mean = jnp.mean(y, axis=(2, 3), keepdims=True)
    var = jnp.mean((y - mean) ** 2, axis=(2, 3), keepdims=True)
    y = (y - mean) * jax.lax.rsqrt(var + 1e-5)
    y = y * gamma.reshape(1, -1, 1, 1) + beta.reshape(1, -1, 1, 1)
    return jnp.where(y >= 0, y, 0.01 * y)


# --------------------------------------------------------------------------- #
if __name__ == "__main__":
    key = jax.random.PRNGKey(0)
    kparam, kx = jax.random.split(key)

    # Matches a PyTorch NCHW input of shape (2, 4, 16, 16);
    # ConvBlock(in_dim=4, out_dim=32, spatial_dim=2, drop_p=0.0).
    N, Cin, H, W = 2, 4, 16, 16
    Cout = 32

    params = init_convblock_params(kparam, Cin, Cout)
    x = jax.random.normal(kx, (N, Cin, H, W), jnp.float32)

    ref = conv_block_reference(x, params)

    # (a) auto tiling (single spatial tile at this toy size).
    fwd = jax.jit(functools.partial(conv_block, params=params))
    out = jax.block_until_ready(fwd(x))
    assert out.shape == (N, Cout, H, W), out.shape
    assert out.dtype == jnp.float32
    assert bool(jnp.all(jnp.isfinite(out)))
    err = float(jnp.max(jnp.abs(out - ref)))
    assert err < 5e-2, f"auto-tile max abs error vs f32 reference: {err}"

    # (b) force a multi-tile spatial grid (4 tiles of 64 rows) to exercise the
    #     two-phase stats-accumulate / normalize path.
    fwd_tiled = jax.jit(functools.partial(conv_block, params=params, tile_m=64))
    out_t = jax.block_until_ready(fwd_tiled(x))
    err_t = float(jnp.max(jnp.abs(out_t - ref)))
    assert err_t < 5e-2, f"tiled max abs error vs f32 reference: {err_t}"

    print("KERNEL_OK")
</pallas_src>

<mosaic_0001>
module attributes {stable_mosaic.version = 11 : i64} {
  func.func @_convblock_kernel(%arg0: i32, %arg1: i32, %arg2: i32, %arg3: memref<1x256x36xbf16, #tpu.memory_space<vmem>>, %arg4: memref<36x128xbf16, #tpu.memory_space<vmem>>, %arg5: memref<2x128xf32, #tpu.memory_space<vmem>>, %arg6: memref<1x256x128xf32, #tpu.memory_space<vmem>>, %arg7: memref<1x256x128xf32, #tpu.memory_space<vmem>>, %arg8: memref<1x128xf32, #tpu.memory_space<vmem>>, %arg9: memref<1x128xf32, #tpu.memory_space<vmem>>) attributes {dimension_semantics = [#tpu.dimension_semantics<parallel>, #tpu.dimension_semantics<arbitrary>, #tpu.dimension_semantics<arbitrary>], iteration_bounds = array<i64: 2, 2, 1>, scalar_prefetch = 0 : i64, scratch_operands = 3 : i64, tpu.core_type = #tpu.core_type<tc>, window_params = [{transform_indices = @transform_0, window_bounds = array<i64: 1, 256, 36>}, {pipeline_mode = #tpu.pipeline_mode<synchronous>, transform_indices = @transform_1, window_bounds = array<i64: 36, 128>}, {pipeline_mode = #tpu.pipeline_mode<synchronous>, transform_indices = @transform_2, window_bounds = array<i64: 2, 128>}, {transform_indices = @transform_3, window_bounds = array<i64: 1, 256, 128>}]} {
    %c0_i32 = arith.constant 0 : i32
    %0 = arith.cmpi eq, %arg1, %c0_i32 : i32
    %c0_i32_0 = arith.constant 0 : i32
    %1 = arith.cmpi eq, %arg2, %c0_i32_0 : i32
    %2 = arith.andi %0, %1 : i1
    %3 = arith.extui %2 : i1 to i32
    %c0_i32_1 = arith.constant 0 : i32
    %4 = arith.cmpi ne, %3, %c0_i32_1 : i32
    scf.if %4 {
      %cst = arith.constant 0.000000e+00 : f32
      %11 = vector.broadcast %cst : f32 to vector<1x128xf32>
      %c0 = arith.constant 0 : index
      %c0_5 = arith.constant 0 : index
      %12 = vector.load %arg8[%c0, %c0_5] : memref<1x128xf32, #tpu.memory_space<vmem>>, vector<1x128xf32>
      tpu.vector_store %arg8[%c0, %c0_5], %11 {strides = array<i32>} : memref<1x128xf32, #tpu.memory_space<vmem>>, vector<1x128xf32>,
      %cst_6 = arith.constant 0.000000e+00 : f32
      %13 = vector.broadcast %cst_6 : f32 to vector<1x128xf32>
      %c0_7 = arith.constant 0 : index
      %c0_8 = arith.constant 0 : index
      %14 = vector.load %arg9[%c0_7, %c0_8] : memref<1x128xf32, #tpu.memory_space<vmem>>, vector<1x128xf32>
      tpu.vector_store %arg9[%c0_7, %c0_8], %13 {strides = array<i32>} : memref<1x128xf32, #tpu.memory_space<vmem>>, vector<1x128xf32>,
    } else {
    }
    %c0_i32_2 = arith.constant 0 : i32
    %5 = arith.cmpi eq, %arg1, %c0_i32_2 : i32
    %6 = arith.extui %5 : i1 to i32
    %c0_i32_3 = arith.constant 0 : i32
    %7 = arith.cmpi ne, %6, %c0_i32_3 : i32
    scf.if %7 {
      %c0 = arith.constant 0 : index
      %c0_5 = arith.constant 0 : index
      %c0_6 = arith.constant 0 : index
      %11 = vector.load %arg3[%c0, %c0_5, %c0_6] : memref<1x256x36xbf16, #tpu.memory_space<vmem>>, vector<1x256x36xbf16>
      %12 = vector.shape_cast %11 : vector<1x256x36xbf16> to vector<256x36xbf16>
      %c0_7 = arith.constant 0 : index
      %c0_8 = arith.constant 0 : index
      %13 = vector.load %arg4[%c0_7, %c0_8] : memref<36x128xbf16, #tpu.memory_space<vmem>>, vector<36x128xbf16>
      %cst = arith.constant dense<0.000000e+00> : vector<256x128xf32>
      %14 = tpu.matmul %12, %13, %cst {dimension_numbers = #tpu.dot_dimension_numbers<[1], [0], [0], [1], [0, 0, 1, 1], [], []>} : vector<256x36xbf16>, vector<36x128xbf16>, vector<256x128xf32> -> vector<256x128xf32>
      %15 = arith.index_cast %arg2 : i32 to index
      %c0_9 = arith.constant 0 : index
      %c0_10 = arith.constant 0 : index
      %16 = vector.load %arg7[%15, %c0_9, %c0_10] : memref<1x256x128xf32, #tpu.memory_space<vmem>>, vector<1x256x128xf32>
      %17 = vector.shape_cast %16 : vector<1x256x128xf32> to vector<256x128xf32>
      %18 = vector.shape_cast %14 : vector<256x128xf32> to vector<1x256x128xf32>
      tpu.vector_store %arg7[%15, %c0_9, %c0_10], %18 {strides = array<i32>} : memref<1x256x128xf32, #tpu.memory_space<vmem>>, vector<1x256x128xf32>,
      %c0_11 = arith.constant 0 : index
      %c0_12 = arith.constant 0 : index
      %19 = vector.load %arg8[%c0_11, %c0_12] : memref<1x128xf32, #tpu.memory_space<vmem>>, vector<1x128xf32>
      %cst_13 = arith.constant dense<0.000000e+00> : vector<128xf32>
      %20 = vector.multi_reduction <add>, %14, %cst_13 [0] : vector<256x128xf32> to vector<128xf32>
      %21 = vector.shape_cast %20 : vector<128xf32> to vector<1x128xf32>
      %22 = arith.addf %19, %21 : vector<1x128xf32>
      %c0_14 = arith.constant 0 : index
      %c0_15 = arith.constant 0 : index
      %23 = vector.load %arg8[%c0_14, %c0_15] : memref<1x128xf32, #tpu.memory_space<vmem>>, vector<1x128xf32>
      tpu.vector_store %arg8[%c0_14, %c0_15], %22 {strides = array<i32>} : memref<1x128xf32, #tpu.memory_space<vmem>>, vector<1x128xf32>,
      %c0_16 = arith.constant 0 : index
      %c0_17 = arith.constant 0 : index
      %24 = vector.load %arg9[%c0_16, %c0_17] : memref<1x128xf32, #tpu.memory_space<vmem>>, vector<1x128xf32>
      %25 = arith.mulf %14, %14 : vector<256x128xf32>
      %cst_18 = arith.constant dense<0.000000e+00> : vector<128xf32>
      %26 = vector.multi_reduction <add>, %25, %cst_18 [0] : vector<256x128xf32> to vector<128xf32>
      %27 = vector.shape_cast %26 : vector<128xf32> to vector<1x128xf32>
      %28 = arith.addf %24, %27 : vector<1x128xf32>
      %c0_19 = arith.constant 0 : index
      %c0_20 = arith.constant 0 : index
      %29 = vector.load %arg9[%c0_19, %c0_20] : memref<1x128xf32, #tpu.memory_space<vmem>>, vector<1x128xf32>
      tpu.vector_store %arg9[%c0_19, %c0_20], %28 {strides = array<i32>} : memref<1x128xf32, #tpu.memory_space<vmem>>, vector<1x128xf32>,
    } else {
    }
    %c1_i32 = arith.constant 1 : i32
    %8 = arith.cmpi eq, %arg1, %c1_i32 : i32
    %9 = arith.extui %8 : i1 to i32
    %c0_i32_4 = arith.constant 0 : i32
    %10 = arith.cmpi ne, %9, %c0_i32_4 : i32
    scf.if %10 {
      %c0 = arith.constant 0 : index
      %c0_5 = arith.constant 0 : index
      %11 = vector.load %arg8[%c0, %c0_5] : memref<1x128xf32, #tpu.memory_space<vmem>>, vector<1x128xf32>
      %cst = arith.constant 3.906250e-03 : f32
      %12 = vector.broadcast %cst : f32 to vector<1x128xf32>
      %13 = arith.mulf %11, %12 : vector<1x128xf32>
      %c0_6 = arith.constant 0 : index
      %c0_7 = arith.constant 0 : index
      %14 = vector.load %arg9[%c0_6, %c0_7] : memref<1x128xf32, #tpu.memory_space<vmem>>, vector<1x128xf32>
      %cst_8 = arith.constant 3.906250e-03 : f32
      %15 = vector.broadcast %cst_8 : f32 to vector<1x128xf32>
      %16 = arith.mulf %14, %15 : vector<1x128xf32>
      %17 = arith.mulf %13, %13 : vector<1x128xf32>
      %18 = arith.subf %16, %17 : vector<1x128xf32>
      %cst_9 = arith.constant 0.000000e+00 : f32
      %19 = vector.broadcast %cst_9 : f32 to vector<1x128xf32>
      %20 = arith.maximumf %18, %19 : vector<1x128xf32>
      %cst_10 = arith.constant 9.99999974E-6 : f32
      %21 = vector.broadcast %cst_10 : f32 to vector<1x128xf32>
      %22 = arith.addf %20, %21 : vector<1x128xf32>
      %23 = math.rsqrt %22 : vector<1x128xf32>
      %c0_11 = arith.constant 0 : index
      %c0_12 = arith.constant 0 : index
      %24 = vector.load %arg5[%c0_11, %c0_12] : memref<2x128xf32, #tpu.memory_space<vmem>>, vector<1x128xf32>
      %25 = arith.mulf %23, %24 : vector<1x128xf32>
      %c1 = arith.constant 1 : index
      %c0_13 = arith.constant 0 : index
      %26 = vector.load %arg5[%c1, %c0_13] : memref<2x128xf32, #tpu.memory_space<vmem>>, vector<1x128xf32>
      %27 = arith.mulf %13, %25 : vector<1x128xf32>
      %28 = arith.subf %26, %27 : vector<1x128xf32>
      %29 = arith.index_cast %arg2 : i32 to index
      %c0_14 = arith.constant 0 : index
      %c0_15 = arith.constant 0 : index
      %30 = vector.load %arg7[%29, %c0_14, %c0_15] : memref<1x256x128xf32, #tpu.memory_space<vmem>>, vector<1x256x128xf32>
      %31 = vector.shape_cast %30 : vector<1x256x128xf32> to vector<256x128xf32>
      %32 = vector.broadcast %25 : vector<1x128xf32> to vector<256x128xf32>
      %33 = arith.mulf %31, %32 : vector<256x128xf32>
      %34 = vector.broadcast %28 : vector<1x128xf32> to vector<256x128xf32>
      %35 = arith.addf %33, %34 : vector<256x128xf32>
      %cst_16 = arith.constant 0.00999999977 : f32
      %36 = vector.broadcast %cst_16 : f32 to vector<256x128xf32>
      %37 = arith.mulf %36, %35 : vector<256x128xf32>
      %38 = arith.maximumf %35, %37 : vector<256x128xf32>
      %c0_17 = arith.constant 0 : index
      %c0_18 = arith.constant 0 : index
      %c0_19 = arith.constant 0 : index
      %39 = vector.load %arg6[%c0_17, %c0_18, %c0_19] : memref<1x256x128xf32, #tpu.memory_space<vmem>>, vector<1x256x128xf32>
      %40 = vector.shape_cast %39 : vector<1x256x128xf32> to vector<256x128xf32>
      %41 = vector.shape_cast %38 : vector<256x128xf32> to vector<1x256x128xf32>
      tpu.vector_store %arg6[%c0_17, %c0_18, %c0_19], %41 {strides = array<i32>} : memref<1x256x128xf32, #tpu.memory_space<vmem>>, vector<1x256x128xf32>,
    } else {
    }
    return
  }
  func.func @transform_0(%arg0: i32, %arg1: i32, %arg2: i32) -> (i32, i32, i32) {
    %c1_i32 = arith.constant 1 : i32
    %0 = arith.subi %c1_i32, %arg1 : i32
    %1 = arith.muli %arg2, %0 : i32
    %c0_i32 = arith.constant 0 : i32
    %2 = arith.muli %c0_i32, %arg1 : i32
    %3 = arith.addi %1, %2 : i32
    %c0_i32_0 = arith.constant 0 : i32
    %c0_i32_1 = arith.constant 0 : i32
    return %arg0, %3, %c0_i32_0 : i32, i32, i32
  }
  func.func @transform_1(%arg0: i32, %arg1: i32, %arg2: i32) -> (i32, i32) {
    %c0_i32 = arith.constant 0 : i32
    %c0_i32_0 = arith.constant 0 : i32
    %c0_i32_1 = arith.constant 0 : i32
    return %c0_i32, %c0_i32_0 : i32, i32
  }
  func.func @transform_2(%arg0: i32, %arg1: i32, %arg2: i32) -> (i32, i32) {
    %c0_i32 = arith.constant 0 : i32
    %c0_i32_0 = arith.constant 0 : i32
    %c0_i32_1 = arith.constant 0 : i32
    return %c0_i32, %c0_i32_0 : i32, i32
  }
  func.func @transform_3(%arg0: i32, %arg1: i32, %arg2: i32) -> (i32, i32, i32) {
    %0 = arith.muli %arg1, %arg2 : i32
    %c0_i32 = arith.constant 0 : i32
    %c0_i32_0 = arith.constant 0 : i32
    return %arg0, %0, %c0_i32 : i32, i32, i32
  }
}

</mosaic_0001>

<llo_original>
// kernel: conv_block.1
$region0: #{conv_block.1}
  #allocation0 [shape = 'u32[]', space=smem, size = 0x4, offset = 0x4, fixed_abs, tag = 'smem constant byte address 0x4 - core index']
  #allocation1 [shape = 'u32[72,128]{1,0:T(1,128)}', space=vmem, size = 0x9000, scoped, tag = 'internal scratch']
  #allocation2 [shape = 'f32[1,256,128]{2,1,0:T(8,128)}', space=vmem, size = 0x20000, scoped, tag = 'scratch operand']
  #allocation3 [shape = 'f32[1,128]{1,0:T(1,128)}', space=vmem, size = 0x200, scoped, tag = 'scratch operand']
  #allocation4 [shape = 'f32[1,128]{1,0:T(1,128)}', space=vmem, size = 0x200, scoped, tag = 'scratch operand']
  %s0 = inlined_call_operand.vmem [shape: bf16[2,256,36], index: 0, kind: input, shape index: {}]
  %s1 = inlined_call_operand.vmem [shape: bf16[36,128], index: 1, kind: input, shape index: {}]
  %s2 = inlined_call_operand.vmem [shape: f32[2,128], index: 2, kind: input, shape index: {}]
  %s3 = inlined_call_operand.hbm [shape: f32[2,256,128], index: 3, kind: output, shape index: {}]
  %s4 = sld [smem:[#allocation0]]
  $region57: #{conv_block.1} parent=0
    _
  %s6 = ssub.s32 1, %s4
  %s7 = scalar_select 0, %s6, %s4
  $region1: #{conv_block.1} parent=0
    #allocation5 [shape = 'u8[262144]{0}', space=vmem, size = 0x40000, scoped, tag = 'output window, operand 0']
    #allocation6 [shape = 's32[2]{0}', space=sflag, size = 0x8, scoped, tag = 'scoped memory for conv_block.1']
    %8 = vsyncpa [#allocation6], 0
    %s9 = scalar_lea.sflag [#allocation6], 1
    %10 = vsyncpa %s9, 0
    loop: start=0, step=1, limit=6
    $region2: #{conv_block.1} parent=1 // loop_pre_header
      _
    $region3: #{conv_block.1} parent=1 // loop_header
      %s12 = sphi 0, %s16
      %p13 = scmp.ge.s32.totalorder %s12, 6
      %s19 = sphi 0, %s38
      %s20 = sphi 0, %s34
      %s21 = sphi 0, %s30
      %s22 = sphi 0, %s19
      %s23 = sphi 0, %s20
      %s24 = sphi 0, %s21
      %s25 = sphi 0, %s22
      %s26 = sphi 0, %s23
      %s27 = sphi 0, %s24
      %s47 = sphi 0, %s49
      %s50 = sphi 0, %s47
      %s51 = sphi 0, %s50
      %s67 = sphi 0, %s51
      %s71 = sphi 0, %s71
      %s73 = sphi 0, %s71
      %s74 = sphi 0, %s73
      %s88 = sphi 0, %s74
      %s92 = sphi 0, %s92
      %s94 = sphi 0, %s92
      %s95 = sphi 0, %s94
      %s109 = sphi 0, %s95
      %s119 = sphi 0, %s121
      %s122 = sphi 0, %s119
      %s123 = sphi 0, %s122
      %s139 = sphi 0, %s123
    $region4: #{conv_block.1} parent=1 // loop_header_branch
      %15 = sbr.rel (%p13) target = $region8
    $region5: #{conv_block.1} parent=1 // loop_body
      %s17 = ssub.s32 %s12, 1
      %s18 = ssub.s32 %s12, 2
      %s28 = sadd.s32 1, %s21
      %p29 = scmp.ge.s32.totalorder %s28, 1
      %s30 = scalar_select %p29, 0, %s28
      %s31 = sadd.s32 1, %s20
      %s32 = scalar_select %p29, %s31, %s20
      %p33 = scmp.ge.s32.totalorder %s32, 2
      %s34 = scalar_select %p33, 0, %s32
      %s35 = sadd.s32 1, %s19
      %s36 = scalar_select %p33, %s35, %s19
      %p37 = scmp.ge.s32.totalorder %s36, 2
      %s38 = scalar_select %p37, 0, %s36
      %s39 = ssub.s32 1, %s20
      %s40 = smul.u32 %s21, %s39
      %s41 = ssub.s32 1, %s34
      %s42 = smul.u32 %s30, %s41
      %s43 = ssub.s32 %s19, %s38
      %s44 = ssub.s32 %s40, %s42
      %s45 = sor.u32 %s43, %s44
      %p46 = scmp.eq.s32.totalorder %s45, 0
      %s48 = sadd.s32 %s47, 1
      %s49 = scalar_select %p46, %s47, %s48
      %p52 = pneg %p46
      %p53 = scmp.eq.s32.totalorder %s12, 3
      %p54 = por %p52, %p53
      %p55 = scmp.ne.s32.totalorder %s47, %s50
      %p56 = scmp.eq.s32.totalorder %s12, 0
      %p57 = por %p55, %p56
      %p58 = scmp.ne.s32.totalorder %s47, %s50
      %p59 = scmp.eq.s32.totalorder %s17, 3
      %p60 = por %p58, %p59
      %p61 = scmp.ne.s32.totalorder %s50, %s51
      %p62 = scmp.eq.s32.totalorder %s17, 0
      %p63 = por %p61, %p62
      %p64 = scmp.ne.s32.totalorder %s50, %s51
      %p65 = scmp.eq.s32.totalorder %s18, 3
      %p66 = por %p64, %p65
      %p68 = scmp.ne.s32.totalorder %s51, %s67
      %p69 = scmp.eq.s32.totalorder %s18, 0
      %p70 = por %p68, %p69
      %s72 = sadd.s32 %s71, 1
      %p75 = scmp.eq.s32.totalorder %s12, 3
      %p76 = scmp.ne.s32.totalorder %s71, %s73
      %p77 = scmp.eq.s32.totalorder %s12, 0
      %p78 = por %p76, %p77
      %p79 = scmp.ne.s32.totalorder %s71, %s73
      %p80 = scmp.eq.s32.totalorder %s17, 3
      %p81 = por %p79, %p80
      %p82 = scmp.ne.s32.totalorder %s73, %s74
      %p83 = scmp.eq.s32.totalorder %s17, 0
      %p84 = por %p82, %p83
      %p85 = scmp.ne.s32.totalorder %s73, %s74
      %p86 = scmp.eq.s32.totalorder %s18, 3
      %p87 = por %p85, %p86
      %p89 = scmp.ne.s32.totalorder %s74, %s88
      %p90 = scmp.eq.s32.totalorder %s18, 0
      %p91 = por %p89, %p90
      %s93 = sadd.s32 %s92, 1
      %p96 = scmp.eq.s32.totalorder %s12, 3
      %p97 = scmp.ne.s32.totalorder %s92, %s94
      %p98 = scmp.eq.s32.totalorder %s12, 0
      %p99 = por %p97, %p98
      %p100 = scmp.ne.s32.totalorder %s92, %s94
      %p101 = scmp.eq.s32.totalorder %s17, 3
      %p102 = por %p100, %p101
      %p103 = scmp.ne.s32.totalorder %s94, %s95
      %p104 = scmp.eq.s32.totalorder %s17, 0
      %p105 = por %p103, %p104
      %p106 = scmp.ne.s32.totalorder %s94, %s95
      %p107 = scmp.eq.s32.totalorder %s18, 3
      %p108 = por %p106, %p107
      %p110 = scmp.ne.s32.totalorder %s95, %s109
      %p111 = scmp.eq.s32.totalorder %s18, 0
      %p112 = por %p110, %p111
      %s113 = smul.u32 %s20, %s21
      %s114 = smul.u32 %s34, %s30
      %s115 = ssub.s32 %s19, %s38
      %s116 = ssub.s32 %s113, %s114
      %s117 = sor.u32 %s115, %s116
      %p118 = scmp.eq.s32.totalorder %s117, 0
      %s120 = sadd.s32 %s119, 1
      %s121 = scalar_select %p118, %s119, %s120
      %p124 = pneg %p118
      %p125 = scmp.eq.s32.totalorder %s12, 3
      %p126 = por %p124, %p125
      %p127 = scmp.ne.s32.totalorder %s119, %s122
      %p128 = scmp.eq.s32.totalorder %s12, 0
      %p129 = por %p127, %p128
      %p130 = scmp.ne.s32.totalorder %s119, %s122
      %p131 = scmp.eq.s32.totalorder %s17, 3
      %p132 = por %p130, %p131
      %p133 = scmp.ne.s32.totalorder %s122, %s123
      %p134 = scmp.eq.s32.totalorder %s17, 0
      %p135 = por %p133, %p134
      %p136 = scmp.ne.s32.totalorder %s122, %s123
      %p137 = scmp.eq.s32.totalorder %s18, 3
      %p138 = por %p136, %p137
      %p140 = scmp.ne.s32.totalorder %s123, %s139
      %p141 = scmp.eq.s32.totalorder %s18, 0
      %p142 = por %p140, %p141
      %p143 = scmp.le.s32.totalorder 1, %s12
      %p144 = scmp.lt.s32.totalorder %s12, 5
      %p145 = pnand %p143, %p144
      %p146 = pneg %p145
      // Predicated region
      $region9: #{conv_block.1} parent=5 // pred_check
        _
      $region10: #{conv_block.1} parent=5 // pred_check_branch
        %148 = sbr.rel (%p145) target = $region12
      $region11: #{conv_block.1} parent=5 // pred_region
        %s149 = ssub.s32 %s12, 1
        // Predicated region
        $region13: #{conv_block.1} parent=11 // pred_check
          %p150 = pneg %p84
        $region14: #{conv_block.1} parent=11 // pred_check_branch
          %152 = sbr.rel (%p150) target = $region16
        $region15: #{conv_block.1} parent=11 // pred_region
          _
        $region16: #{conv_block.1} parent=11 // pred_fallthru
          _
        // Predicated region
        $region17: #{conv_block.1} parent=11 // pred_check
          %p153 = pneg %p105
        $region18: #{conv_block.1} parent=11 // pred_check_branch
          %155 = sbr.rel (%p153) target = $region20
        $region19: #{conv_block.1} parent=11 // pred_region
          _
        $region20: #{conv_block.1} parent=11 // pred_fallthru
          _
      $region12: #{conv_block.1} parent=5 // pred_fallthru
        _
      %p156 = scmp.lt.s32.totalorder %s12, 4
      // Predicated region
      $region21: #{conv_block.1} parent=5 // pred_check
        %p157 = pneg %p156
      $region22: #{conv_block.1} parent=5 // pred_check_branch
        %159 = sbr.rel (%p157) target = $region24
      $region23: #{conv_block.1} parent=5 // pred_region
        // Predicated region
        $region25: #{conv_block.1} parent=23 // pred_check
          %p160 = pneg %p57
        $region26: #{conv_block.1} parent=23 // pred_check_branch
          %162 = sbr.rel (%p160) target = $region28
        $region27: #{conv_block.1} parent=23 // pred_region
          %s163 = ssub.s32 1, %s20
          %s164 = smul.u32 %s21, %s163
          %s165 = smul.u32 32, %s164
          %p166 = scmp.lt.s32.totalorder %s19, 1
          %s167 = scalar_select %p166, %s19, 1
          %p168 = scmp.lt.s32.totalorder %s165, 31
          %s169 = scalar_select %p168, %s165, 31
          %s170 = smul.addr %s167, 32
          %s171 = sadd.s32 %s169, %s170
          %s172 = smul.addr %s171, 4
          %s173 = scalar_lea.vmem %s0, %s172
          %s174 = ssub.s32 1, %s20
          %s175 = smul.u32 %s21, %s174
          %s176 = smul.u32 32, %s175
        $region28: #{conv_block.1} parent=23 // pred_fallthru
          _
      $region24: #{conv_block.1} parent=5 // pred_fallthru
        _
      %p177 = scmp.le.s32.totalorder 1, %s12
      %p178 = scmp.lt.s32.totalorder %s12, 5
      %p179 = pnand %p177, %p178
      %p180 = pneg %p179
      // Predicated region
      $region29: #{conv_block.1} parent=5 // pred_check
        _
      $region30: #{conv_block.1} parent=5 // pred_check_branch
        %182 = sbr.rel (%p179) target = $region32
      $region31: #{conv_block.1} parent=5 // pred_region
        %s183 = ssub.s32 %s12, 1
        %s184 = ssub.s32 1, %s23
        %s185 = smul.u32 %s24, %s184
        %s186 = smul.u32 32, %s185
        %p187 = scmp.lt.s32.totalorder %s22, 1
        %s188 = scalar_select %p187, %s22, 1
        %p189 = scmp.lt.s32.totalorder %s186, 31
        %s190 = scalar_select %p189, %s186, 31
        %s191 = smul.addr %s188, 32
        %s192 = sadd.s32 %s190, %s191
        %s193 = smul.addr %s192, 4
        %s194 = scalar_lea.vmem %s0, %s193
        %p195 = pneg %p63
        %p196 = pneg %p60
        %p197 = pneg %p84
        %p198 = pneg %p81
        %p199 = pneg %p105
        %p200 = pneg %p102
        %p201 = pneg %p135
        %p202 = pneg %p132
        %s203 = sand.u32 %s122, 1
        %s204 = scalar_lea.sflag [#allocation6], %s203
        %s205 = sand.u32 %s122, 1
        %s206 = smul.addr %s205, 256
        %s207 = scalar_lea.vmem [#allocation5], %s206
        %s208 = ssub.s32 1, %s23
        %s209 = smul.u32 %s24, %s208
        %s210 = smul.u32 32, %s209
        %p211 = scmp.lt.s32.totalorder %s22, 1
        %s212 = scalar_select %p211, %s22, 1
        %p213 = scmp.lt.s32.totalorder %s210, 31
        %s214 = scalar_select %p213, %s210, 31
        %s215 = smul.addr %s212, 32
        %s216 = sadd.s32 %s214, %s215
        %s217 = smul.addr %s216, 4
        %s218 = scalar_lea.vmem %s0, %s217
        %s219 = ssub.s32 1, %s23
        %s220 = smul.u32 %s24, %s219
        %s221 = smul.u32 32, %s220
        %s222 = smul.u32 %s23, %s24
        %s223 = smul.u32 32, %s222
        %p225 = scmp.eq.s32.totalorder %s23, 0
        %p226 = scmp.eq.s32.totalorder %s24, 0
        %p227 = pnand %p225, %p226
        %p228 = pneg %p227
        // Predicated region
        $region33: #{conv_block.1} parent=31 // pred_check
          _
        $region34: #{conv_block.1} parent=31 // pred_check_branch
          %230 = sbr.rel (%p227) target = $region36
        $region35: #{conv_block.1} parent=31 // pred_region
          %231 = vst [vmem:[#allocation3] sm:$0x1] 0.0
          %232 = vst [vmem:[#allocation4] sm:$0x1] 0.0
        $region36: #{conv_block.1} parent=31 // pred_fallthru
          _
        // Predicated region
        $region37: #{conv_block.1} parent=31 // pred_check
          %p233 = pneg %p225
        $region38: #{conv_block.1} parent=31 // pred_check_branch
          %235 = sbr.rel (%p233) target = $region40
        $region39: #{conv_block.1} parent=31 // pred_region
          %v236 = vld [vmem:[%s218] sm:$0xf]
          %v237 = vld [vmem:[%s218 + $0x4] sm:$0xf]
          %v238 = vld [vmem:[%s218 + $0x8] sm:$0xf]
          %v239 = vld [vmem:[%s218 + $0xc] sm:$0xf]
          %v240 = vld [vmem:[%s218 + $0x10] sm:$0xf]
          %v241 = vld [vmem:[%s218 + $0x14] sm:$0xf]
          %v242 = vld [vmem:[%s218 + $0x18] sm:$0xf]
          %v243 = vld [vmem:[%s218 + $0x1c] sm:$0xf]
          %v244 = vld [vmem:[%s218 + $0x20] sm:$0xf]
          %v245 = vld [vmem:[%s218 + $0x24] sm:$0xf]
          %v246 = vld [vmem:[%s218 + $0x28] sm:$0xf]
          %v247 = vld [vmem:[%s218 + $0x2c] sm:$0xf]
          %v248 = vld [vmem:[%s218 + $0x30] sm:$0xf]
          %v249 = vld [vmem:[%s218 + $0x34] sm:$0xf]
          %v250 = vld [vmem:[%s218 + $0x38] sm:$0xf]
          %v251 = vld [vmem:[%s218 + $0x3c] sm:$0xf]
          %v252 = vld [vmem:[%s218 + $0x40] sm:$0xf]
          %v253 = vld [vmem:[%s218 + $0x44] sm:$0xf]
          %v254 = vld [vmem:[%s218 + $0x48] sm:$0xf]
          %v255 = vld [vmem:[%s218 + $0x4c] sm:$0xf]
          %v256 = vld [vmem:[%s218 + $0x50] sm:$0xf]
          %v257 = vld [vmem:[%s218 + $0x54] sm:$0xf]
          %v258 = vld [vmem:[%s218 + $0x58] sm:$0xf]
          %v259 = vld [vmem:[%s218 + $0x5c] sm:$0xf]
          %v260 = vld [vmem:[%s218 + $0x60] sm:$0xf]
          %v261 = vld [vmem:[%s218 + $0x64] sm:$0xf]
          %v262 = vld [vmem:[%s218 + $0x68] sm:$0xf]
          %v263 = vld [vmem:[%s218 + $0x6c] sm:$0xf]
          %v264 = vld [vmem:[%s218 + $0x70] sm:$0xf]
          %v265 = vld [vmem:[%s218 + $0x74] sm:$0xf]
          %v266 = vld [vmem:[%s218 + $0x78] sm:$0xf]
          %v267 = vld [vmem:[%s218 + $0x7c] sm:$0xf]
          %v268 = vld [vmem:[%s1] sm:$0xf]
          %v269 = vld [vmem:[%s1 + $0x4] sm:$0xf]
          %v270 = vld [vmem:[%s1 + $0x8] sm:$0xf]
          %v271 = vld [vmem:[%s1 + $0xc] sm:$0xf]
          %v272 = vld [vmem:[%s1 + $0x10] sm:$0x3]
          %v305 = vunpack.c.l.b16 %v236
          %v306 = vunpack.c.l.b16 %v237
          %v307 = vunpack.c.l.b16 %v238
          %v308 = vunpack.c.l.b16 %v239
          %v309 = vunpack.c.l.b16 %v240
          %v310 = vunpack.c.l.b16 %v241
          %v311 = vunpack.c.l.b16 %v242
          %v312 = vunpack.c.l.b16 %v243
          %v313 = vunpack.c.l.b16 %v244
          %v314 = vunpack.c.l.b16 %v245
          %v315 = vunpack.c.l.b16 %v246
          %v316 = vunpack.c.l.b16 %v247
          %v317 = vunpack.c.l.b16 %v248
          %v318 = vunpack.c.l.b16 %v249
          %v319 = vunpack.c.l.b16 %v250
          %v320 = vunpack.c.l.b16 %v251
          %v321 = vunpack.c.l.b16 %v252
          %v322 = vunpack.c.l.b16 %v253
          %v323 = vunpack.c.l.b16 %v254
          %v324 = vunpack.c.l.b16 %v255
          %v325 = vunpack.c.l.b16 %v256
          %v326 = vunpack.c.l.b16 %v257
          %v327 = vunpack.c.l.b16 %v258
          %v328 = vunpack.c.l.b16 %v259
          %v329 = vunpack.c.l.b16 %v260
          %v330 = vunpack.c.l.b16 %v261
          %v331 = vunpack.c.l.b16 %v262
          %v332 = vunpack.c.l.b16 %v263
          %v333 = vunpack.c.l.b16 %v264
          %v334 = vunpack.c.l.b16 %v265
          %v335 = vunpack.c.l.b16 %v266
          %v336 = vunpack.c.l.b16 %v267
          %v337 = vpack.c.b16 %v306, %v305
          %v338 = vpack.c.b16 %v308, %v307
          %v339 = vpack.c.b16 %v310, %v309
          %v340 = vpack.c.b16 %v312, %v311
          %v341 = vpack.c.b16 %v314, %v313
          %v342 = vpack.c.b16 %v316, %v315
          %v343 = vpack.c.b16 %v318, %v317
          %v344 = vpack.c.b16 %v320, %v319
          %v345 = vpack.c.b16 %v322, %v321
          %v346 = vpack.c.b16 %v324, %v323
          %v347 = vpack.c.b16 %v326, %v325
          %v348 = vpack.c.b16 %v328, %v327
          %v349 = vpack.c.b16 %v330, %v329
          %v350 = vpack.c.b16 %v332, %v331
          %v351 = vpack.c.b16 %v334, %v333
          %v352 = vpack.c.b16 %v336, %v335
          %v358 = vunpack.c.l.b16 %v268
          %v359 = vunpack.c.l.b16 %v269
          %v360 = vunpack.c.l.b16 %v270
          %v361 = vunpack.c.l.b16 %v271
          %v362 = vunpack.c.l.b16 %v272
          %v363 = vpack.c.b16 %v359, %v358
          %v364 = vpack.c.b16 %v361, %v360
          %v365 = vpack.c.b16 %v362, %v362
          %vm368 = vcmask 293888
          %v370 = vsel %vm368, %v337, 0
          %v373 = vsel %vm368, %v338, 0
          %v376 = vsel %vm368, %v339, 0
          %v379 = vsel %vm368, %v340, 0
          %v382 = vsel %vm368, %v341, 0
          %v385 = vsel %vm368, %v342, 0
          %v388 = vsel %vm368, %v343, 0
          %v391 = vsel %vm368, %v344, 0
          %v394 = vsel %vm368, %v345, 0
          %v397 = vsel %vm368, %v346, 0
          %v400 = vsel %vm368, %v347, 0
          %v403 = vsel %vm368, %v348, 0
          %v406 = vsel %vm368, %v349, 0
          %v409 = vsel %vm368, %v350, 0
          %v412 = vsel %vm368, %v351, 0
          %v415 = vsel %vm368, %v352, 0
          %vm417 = vcmask 1041408
          %v419 = vsel %vm417, %v365, 0
          %421 = vmatpush.bf16.msra.mxu0 0
          %422 = vmatpush.bf16.msra.mxu0 0
          %423 = vmatpush.bf16.msra.mxu0 0
          %424 = vmatpush.bf16.msra.mxu0 0
          %425 = vmatpush.bf16.msra.mxu0 0
          %426 = vmatpush.bf16.msra.mxu0 %v419
          %427 = vmatpush.bf16.msra.mxu0 %v364
          %428 = vmatpush.bf16.msra.mxu0 %v363
          %429 = vmatmul.bf16.gmra.mxu0 %v370
          %v430 = vpop.f32.mrf.mxu0
          %v431 = vadd.f32 0.0, %v430
          %v432 = vpop.f32.mrf.mxu0
          %v433 = vadd.f32 0.0, %v432
          %434 = vmatmul.bf16.gmra.mxu0 %v373
          %v435 = vpop.f32.mrf.mxu0
          %v436 = vadd.f32 0.0, %v435
          %v437 = vpop.f32.mrf.mxu0
          %v438 = vadd.f32 0.0, %v437
          %439 = vmatmul.bf16.gmra.mxu0 %v376
          %v440 = vpop.f32.mrf.mxu0
          %v441 = vadd.f32 0.0, %v440
          %v442 = vpop.f32.mrf.mxu0
          %v443 = vadd.f32 0.0, %v442
          %444 = vmatmul.bf16.gmra.mxu0 %v379
          %v445 = vpop.f32.mrf.mxu0
          %v446 = vadd.f32 0.0, %v445
          %v447 = vpop.f32.mrf.mxu0
          %v448 = vadd.f32 0.0, %v447
          %449 = vmatmul.bf16.gmra.mxu0 %v382
          %v450 = vpop.f32.mrf.mxu0
          %v451 = vadd.f32 0.0, %v450
          %v452 = vpop.f32.mrf.mxu0
          %v453 = vadd.f32 0.0, %v452
          %454 = vmatmul.bf16.gmra.mxu0 %v385
          %v455 = vpop.f32.mrf.mxu0
          %v456 = vadd.f32 0.0, %v455
          %v457 = vpop.f32.mrf.mxu0
          %v458 = vadd.f32 0.0, %v457
          %459 = vmatmul.bf16.gmra.mxu0 %v388
          %v460 = vpop.f32.mrf.mxu0
          %v461 = vadd.f32 0.0, %v460
          %v462 = vpop.f32.mrf.mxu0
          %v463 = vadd.f32 0.0, %v462
          %464 = vmatmul.bf16.gmra.mxu0 %v391
          %v465 = vpop.f32.mrf.mxu0
          %v466 = vadd.f32 0.0, %v465
          %v467 = vpop.f32.mrf.mxu0
          %v468 = vadd.f32 0.0, %v467
          %469 = vmatmul.bf16.gmra.mxu0 %v394
          %v470 = vpop.f32.mrf.mxu0
          %v471 = vadd.f32 0.0, %v470
          %v472 = vpop.f32.mrf.mxu0
          %v473 = vadd.f32 0.0, %v472
          %474 = vmatmul.bf16.gmra.mxu0 %v397
          %v475 = vpop.f32.mrf.mxu0
          %v476 = vadd.f32 0.0, %v475
          %v477 = vpop.f32.mrf.mxu0
          %v478 = vadd.f32 0.0, %v477
          %479 = vmatmul.bf16.gmra.mxu0 %v400
          %v480 = vpop.f32.mrf.mxu0
          %v481 = vadd.f32 0.0, %v480
          %v482 = vpop.f32.mrf.mxu0
          %v483 = vadd.f32 0.0, %v482
          %484 = vmatmul.bf16.gmra.mxu0 %v403
          %v485 = vpop.f32.mrf.mxu0
          %v486 = vadd.f32 0.0, %v485
          %v487 = vpop.f32.mrf.mxu0
          %v488 = vadd.f32 0.0, %v487
          %489 = vmatmul.bf16.gmra.mxu0 %v406
          %v490 = vpop.f32.mrf.mxu0
          %v491 = vadd.f32 0.0, %v490
          %v492 = vpop.f32.mrf.mxu0
          %v493 = vadd.f32 0.0, %v492
          %494 = vmatmul.bf16.gmra.mxu0 %v409
          %v495 = vpop.f32.mrf.mxu0
          %v496 = vadd.f32 0.0, %v495
          %v497 = vpop.f32.mrf.mxu0
          %v498 = vadd.f32 0.0, %v497
          %499 = vmatmul.bf16.gmra.mxu0 %v412
          %v500 = vpop.f32.mrf.mxu0
          %v501 = vadd.f32 0.0, %v500
          %v502 = vpop.f32.mrf.mxu0
          %v503 = vadd.f32 0.0, %v502
          %504 = vmatmul.bf16.gmra.mxu0 %v415
          %v505 = vpop.f32.mrf.mxu0
          %v506 = vadd.f32 0.0, %v505
          %v507 = vpop.f32.mrf.mxu0
          %v508 = vadd.f32 0.0, %v507
          %509 = vdwg.mxu0
          %s510 = smul.u32 %s24, 256
          %s511 = scalar_lea.vmem [#allocation2], %s510
          %512 = vst [vmem:[%s511] sm:$0xff] %v431
          %513 = vst [vmem:[%s511 + $0x8] sm:$0xff] %v433
          %514 = vst [vmem:[%s511 + $0x10] sm:$0xff] %v436
          %515 = vst [vmem:[%s511 + $0x18] sm:$0xff] %v438
          %516 = vst [vmem:[%s511 + $0x20] sm:$0xff] %v441
          %517 = vst [vmem:[%s511 + $0x28] sm:$0xff] %v443
          %518 = vst [vmem:[%s511 + $0x30] sm:$0xff] %v446
          %519 = vst [vmem:[%s511 + $0x38] sm:$0xff] %v448
          %520 = vst [vmem:[%s511 + $0x40] sm:$0xff] %v451
          %521 = vst [vmem:[%s511 + $0x48] sm:$0xff] %v453
          %522 = vst [vmem:[%s511 + $0x50] sm:$0xff] %v456
          %523 = vst [vmem:[%s511 + $0x58] sm:$0xff] %v458
          %524 = vst [vmem:[%s511 + $0x60] sm:$0xff] %v461
          %525 = vst [vmem:[%s511 + $0x68] sm:$0xff] %v463
          %526 = vst [vmem:[%s511 + $0x70] sm:$0xff] %v466
          %527 = vst [vmem:[%s511 + $0x78] sm:$0xff] %v468
          %528 = vst [vmem:[%s511 + $0x80] sm:$0xff] %v471
          %529 = vst [vmem:[%s511 + $0x88] sm:$0xff] %v473
          %530 = vst [vmem:[%s511 + $0x90] sm:$0xff] %v476
          %531 = vst [vmem:[%s511 + $0x98] sm:$0xff] %v478
          %532 = vst [vmem:[%s511 + $0xa0] sm:$0xff] %v481
          %533 = vst [vmem:[%s511 + $0xa8] sm:$0xff] %v483
          %534 = vst [vmem:[%s511 + $0xb0] sm:$0xff] %v486
          %535 = vst [vmem:[%s511 + $0xb8] sm:$0xff] %v488
          %536 = vst [vmem:[%s511 + $0xc0] sm:$0xff] %v491
          %537 = vst [vmem:[%s511 + $0xc8] sm:$0xff] %v493
          %538 = vst [vmem:[%s511 + $0xd0] sm:$0xff] %v496
          %539 = vst [vmem:[%s511 + $0xd8] sm:$0xff] %v498
          %540 = vst [vmem:[%s511 + $0xe0] sm:$0xff] %v501
          %541 = vst [vmem:[%s511 + $0xe8] sm:$0xff] %v503
          %542 = vst [vmem:[%s511 + $0xf0] sm:$0xff] %v506
          %543 = vst [vmem:[%s511 + $0xf8] sm:$0xff] %v508
          %v544 = vld [vmem:[#allocation3] sm:$0x1]
          %v545 = vadd.f32 %v431, %v433
          %v546 = vadd.f32 %v545, %v436
          %v547 = vadd.f32 %v546, %v438
          %v548 = vadd.f32 %v547, %v441
          %v549 = vadd.f32 %v548, %v443
          %v550 = vadd.f32 %v549, %v446
          %v551 = vadd.f32 %v550, %v448
          %v552 = vadd.f32 %v551, %v451
          %v553 = vadd.f32 %v552, %v453
          %v554 = vadd.f32 %v553, %v456
          %v555 = vadd.f32 %v554, %v458
          %v556 = vadd.f32 %v555, %v461
          %v557 = vadd.f32 %v556, %v463
          %v558 = vadd.f32 %v557, %v466
          %v559 = vadd.f32 %v558, %v468
          %v560 = vadd.f32 %v559, %v471
          %v561 = vadd.f32 %v560, %v473
          %v562 = vadd.f32 %v561, %v476
          %v563 = vadd.f32 %v562, %v478
          %v564 = vadd.f32 %v563, %v481
          %v565 = vadd.f32 %v564, %v483
          %v566 = vadd.f32 %v565, %v486
          %v567 = vadd.f32 %v566, %v488
          %v568 = vadd.f32 %v567, %v491
          %v569 = vadd.f32 %v568, %v493
          %v570 = vadd.f32 %v569, %v496
          %v571 = vadd.f32 %v570, %v498
          %v572 = vadd.f32 %v571, %v501
          %v573 = vadd.f32 %v572, %v503
          %v574 = vadd.f32 %v573, %v506
          %v575 = vadd.f32 %v574, %v508
          %v576 = vrot.slane %v575, 4
          %v577 = vadd.f32 %v575, %v576
          %v578 = vrot.slane %v577, 2
          %v579 = vadd.f32 %v577, %v578
          %v580 = vrot.slane %v579, 1
          %v581 = vadd.f32 %v579, %v580
          %v582 = vadd.f32 %v544, %v581
          %583 = vst [vmem:[#allocation3] sm:$0x1] %v582
          %v584 = vld [vmem:[#allocation4] sm:$0x1]
          %v585 = vmul.f32 %v431, %v431
          %v586 = vmul.f32 %v433, %v433
          %v587 = vmul.f32 %v436, %v436
          %v588 = vmul.f32 %v438, %v438
          %v589 = vmul.f32 %v441, %v441
          %v590 = vmul.f32 %v443, %v443
          %v591 = vmul.f32 %v446, %v446
          %v592 = vmul.f32 %v448, %v448
          %v593 = vmul.f32 %v451, %v451
          %v594 = vmul.f32 %v453, %v453
          %v595 = vmul.f32 %v456, %v456
          %v596 = vmul.f32 %v458, %v458
          %v597 = vmul.f32 %v461, %v461
          %v598 = vmul.f32 %v463, %v463
          %v599 = vmul.f32 %v466, %v466
          %v600 = vmul.f32 %v468, %v468
          %v601 = vmul.f32 %v471, %v471
          %v602 = vmul.f32 %v473, %v473
          %v603 = vmul.f32 %v476, %v476
          %v604 = vmul.f32 %v478, %v478
          %v605 = vmul.f32 %v481, %v481
          %v606 = vmul.f32 %v483, %v483
          %v607 = vmul.f32 %v486, %v486
          %v608 = vmul.f32 %v488, %v488
          %v609 = vmul.f32 %v491, %v491
          %v610 = vmul.f32 %v493, %v493
          %v611 = vmul.f32 %v496, %v496
          %v612 = vmul.f32 %v498, %v498
          %v613 = vmul.f32 %v501, %v501
          %v614 = vmul.f32 %v503, %v503
          %v615 = vmul.f32 %v506, %v506
          %v616 = vmul.f32 %v508, %v508
          %v617 = vadd.f32 %v585, %v586
          %v618 = vadd.f32 %v617, %v587
          %v619 = vadd.f32 %v618, %v588
          %v620 = vadd.f32 %v619, %v589
          %v621 = vadd.f32 %v620, %v590
          %v622 = vadd.f32 %v621, %v591
          %v623 = vadd.f32 %v622, %v592
          %v624 = vadd.f32 %v623, %v593
          %v625 = vadd.f32 %v624, %v594
          %v626 = vadd.f32 %v625, %v595
          %v627 = vadd.f32 %v626, %v596
          %v628 = vadd.f32 %v627, %v597
          %v629 = vadd.f32 %v628, %v598
          %v630 = vadd.f32 %v629, %v599
          %v631 = vadd.f32 %v630, %v600
          %v632 = vadd.f32 %v631, %v601
          %v633 = vadd.f32 %v632, %v602
          %v634 = vadd.f32 %v633, %v603
          %v635 = vadd.f32 %v634, %v604
          %v636 = vadd.f32 %v635, %v605
          %v637 = vadd.f32 %v636, %v606
          %v638 = vadd.f32 %v637, %v607
          %v639 = vadd.f32 %v638, %v608
          %v640 = vadd.f32 %v639, %v609
          %v641 = vadd.f32 %v640, %v610
          %v642 = vadd.f32 %v641, %v611
          %v643 = vadd.f32 %v642, %v612
          %v644 = vadd.f32 %v643, %v613
          %v645 = vadd.f32 %v644, %v614
          %v646 = vadd.f32 %v645, %v615
          %v647 = vadd.f32 %v646, %v616
          %v648 = vrot.slane %v647, 4
          %v649 = vadd.f32 %v647, %v648
          %v650 = vrot.slane %v649, 2
          %v651 = vadd.f32 %v649, %v650
          %v652 = vrot.slane %v651, 1
          %v653 = vadd.f32 %v651, %v652
          %v654 = vadd.f32 %v584, %v653
          %655 = vst [vmem:[#allocation4] sm:$0x1] %v654
        $region40: #{conv_block.1} parent=31 // pred_fallthru
          _
        %p656 = scmp.eq.s32.totalorder %s23, 1
        // Predicated region
        $region41: #{conv_block.1} parent=31 // pred_check
          %p657 = pneg %p656
        $region42: #{conv_block.1} parent=31 // pred_check_branch
          %659 = sbr.rel (%p657) target = $region44
        $region43: #{conv_block.1} parent=31 // pred_region
          %v660 = vld [vmem:[#allocation3] sm:$0x1]
          %v661 = vmul.f32 %v660, 0.00390625
          %v662 = vld [vmem:[#allocation4] sm:$0x1]
          %v663 = vmul.f32 %v662, 0.00390625
          %v664 = vmul.f32 %v661, %v661
          %v665 = vsub.f32 %v663, %v664
          %v666 = vmax.f32 %v665, 0.0
          %v667 = vadd.f32 %v666, 1e-05
          %v668 = vrsqrt.pop %v667
          %v669 = vmul.f32 %v668, %v667
          %v670 = vmul.f32 %v669, %v668
          %v671 = vmul.f32 0.5, %v670
          %v672 = vsub.f32 1.5, %v671
          %v673 = vmul.f32 %v668, %v672
          %vm674 = vweird.f32 %v667
          %vm675 = vweird.f32 %v668
          %vm676 = vmor %vm674, %vm675
          %v677 = vsel %vm676, %v668, %v673
          %v678 = vld [vmem:[%s2] sm:$0x1]
          %v679 = vmul.f32 %v677, %v678
          %v680 = vld [vmem:[%s2 + $0x1] sm:$0x1]
          %v681 = vmul.f32 %v661, %v679
          %v682 = vsub.f32 %v680, %v681
          %s683 = smul.u32 %s24, 256
          %s684 = scalar_lea.vmem [#allocation2], %s683
          %v685 = vld [vmem:[%s684] sm:$0xff]
          %v686 = vld [vmem:[%s684 + $0x8] sm:$0xff]
          %v687 = vld [vmem:[%s684 + $0x10] sm:$0xff]
          %v688 = vld [vmem:[%s684 + $0x18] sm:$0xff]
          %v689 = vld [vmem:[%s684 + $0x20] sm:$0xff]
          %v690 = vld [vmem:[%s684 + $0x28] sm:$0xff]
          %v691 = vld [vmem:[%s684 + $0x30] sm:$0xff]
          %v692 = vld [vmem:[%s684 + $0x38] sm:$0xff]
          %v693 = vld [vmem:[%s684 + $0x40] sm:$0xff]
          %v694 = vld [vmem:[%s684 + $0x48] sm:$0xff]
          %v695 = vld [vmem:[%s684 + $0x50] sm:$0xff]
          %v696 = vld [vmem:[%s684 + $0x58] sm:$0xff]
          %v697 = vld [vmem:[%s684 + $0x60] sm:$0xff]
          %v698 = vld [vmem:[%s684 + $0x68] sm:$0xff]
          %v699 = vld [vmem:[%s684 + $0x70] sm:$0xff]
          %v700 = vld [vmem:[%s684 + $0x78] sm:$0xff]
          %v701 = vld [vmem:[%s684 + $0x80] sm:$0xff]
          %v702 = vld [vmem:[%s684 + $0x88] sm:$0xff]
          %v703 = vld [vmem:[%s684 + $0x90] sm:$0xff]
          %v704 = vld [vmem:[%s684 + $0x98] sm:$0xff]
          %v705 = vld [vmem:[%s684 + $0xa0] sm:$0xff]
          %v706 = vld [vmem:[%s684 + $0xa8] sm:$0xff]
          %v707 = vld [vmem:[%s684 + $0xb0] sm:$0xff]
          %v708 = vld [vmem:[%s684 + $0xb8] sm:$0xff]
          %v709 = vld [vmem:[%s684 + $0xc0] sm:$0xff]
          %v710 = vld [vmem:[%s684 + $0xc8] sm:$0xff]
          %v711 = vld [vmem:[%s684 + $0xd0] sm:$0xff]
          %v712 = vld [vmem:[%s684 + $0xd8] sm:$0xff]
          %v713 = vld [vmem:[%s684 + $0xe0] sm:$0xff]
          %v714 = vld [vmem:[%s684 + $0xe8] sm:$0xff]
          %v715 = vld [vmem:[%s684 + $0xf0] sm:$0xff]
          %v716 = vld [vmem:[%s684 + $0xf8] sm:$0xff]
          %v718 = vperm.slane %v679, 0
          %v720 = vmul.f32 %v685, %v718
          %v721 = vmul.f32 %v686, %v718
          %v722 = vmul.f32 %v687, %v718
          %v723 = vmul.f32 %v688, %v718
          %v724 = vmul.f32 %v689, %v718
          %v725 = vmul.f32 %v690, %v718
          %v726 = vmul.f32 %v691, %v718
          %v727 = vmul.f32 %v692, %v718
          %v728 = vmul.f32 %v693, %v718
          %v729 = vmul.f32 %v694, %v718
          %v730 = vmul.f32 %v695, %v718
          %v731 = vmul.f32 %v696, %v718
          %v732 = vmul.f32 %v697, %v718
          %v733 = vmul.f32 %v698, %v718
          %v734 = vmul.f32 %v699, %v718
          %v735 = vmul.f32 %v700, %v718
          %v736 = vmul.f32 %v701, %v718
          %v737 = vmul.f32 %v702, %v718
          %v738 = vmul.f32 %v703, %v718
          %v739 = vmul.f32 %v704, %v718
          %v740 = vmul.f32 %v705, %v718
          %v741 = vmul.f32 %v706, %v718
          %v742 = vmul.f32 %v707, %v718
          %v743 = vmul.f32 %v708, %v718
          %v744 = vmul.f32 %v709, %v718
          %v745 = vmul.f32 %v710, %v718
          %v746 = vmul.f32 %v711, %v718
          %v747 = vmul.f32 %v712, %v718
          %v748 = vmul.f32 %v713, %v718
          %v749 = vmul.f32 %v714, %v718
          %v750 = vmul.f32 %v715, %v718
          %v751 = vmul.f32 %v716, %v718
          %v752 = vperm.slane %v682, 0
          %v753 = vadd.f32 %v720, %v752
          %v754 = vadd.f32 %v721, %v752
          %v755 = vadd.f32 %v722, %v752
          %v756 = vadd.f32 %v723, %v752
          %v757 = vadd.f32 %v724, %v752
          %v758 = vadd.f32 %v725, %v752
          %v759 = vadd.f32 %v726, %v752
          %v760 = vadd.f32 %v727, %v752
          %v761 = vadd.f32 %v728, %v752
          %v762 = vadd.f32 %v729, %v752
          %v763 = vadd.f32 %v730, %v752
          %v764 = vadd.f32 %v731, %v752
          %v765 = vadd.f32 %v732, %v752
          %v766 = vadd.f32 %v733, %v752
          %v767 = vadd.f32 %v734, %v752
          %v768 = vadd.f32 %v735, %v752
          %v769 = vadd.f32 %v736, %v752
          %v770 = vadd.f32 %v737, %v752
          %v771 = vadd.f32 %v738, %v752
          %v772 = vadd.f32 %v739, %v752
          %v773 = vadd.f32 %v740, %v752
          %v774 = vadd.f32 %v741, %v752
          %v775 = vadd.f32 %v742, %v752
          %v776 = vadd.f32 %v743, %v752
          %v777 = vadd.f32 %v744, %v752
          %v778 = vadd.f32 %v745, %v752
          %v779 = vadd.f32 %v746, %v752
          %v780 = vadd.f32 %v747, %v752
          %v781 = vadd.f32 %v748, %v752
          %v782 = vadd.f32 %v749, %v752
          %v783 = vadd.f32 %v750, %v752
          %v784 = vadd.f32 %v751, %v752
          %v785 = vmul.f32 %v753, 0.01
          %v786 = vmul.f32 %v754, 0.01
          %v787 = vmul.f32 %v755, 0.01
          %v788 = vmul.f32 %v756, 0.01
          %v789 = vmul.f32 %v757, 0.01
          %v790 = vmul.f32 %v758, 0.01
          %v791 = vmul.f32 %v759, 0.01
          %v792 = vmul.f32 %v760, 0.01
          %v793 = vmul.f32 %v761, 0.01
          %v794 = vmul.f32 %v762, 0.01
          %v795 = vmul.f32 %v763, 0.01
          %v796 = vmul.f32 %v764, 0.01
          %v797 = vmul.f32 %v765, 0.01
          %v798 = vmul.f32 %v766, 0.01
          %v799 = vmul.f32 %v767, 0.01
          %v800 = vmul.f32 %v768, 0.01
          %v801 = vmul.f32 %v769, 0.01
          %v802 = vmul.f32 %v770, 0.01
          %v803 = vmul.f32 %v771, 0.01
          %v804 = vmul.f32 %v772, 0.01
          %v805 = vmul.f32 %v773, 0.01
          %v806 = vmul.f32 %v774, 0.01
          %v807 = vmul.f32 %v775, 0.01
          %v808 = vmul.f32 %v776, 0.01
          %v809 = vmul.f32 %v777, 0.01
          %v810 = vmul.f32 %v778, 0.01
          %v811 = vmul.f32 %v779, 0.01
          %v812 = vmul.f32 %v780, 0.01
          %v813 = vmul.f32 %v781, 0.01
          %v814 = vmul.f32 %v782, 0.01
          %v815 = vmul.f32 %v783, 0.01
          %v816 = vmul.f32 %v784, 0.01
          %v817 = vmax.f32 %v753, %v785
          %v818 = vmax.f32 %v754, %v786
          %v819 = vmax.f32 %v755, %v787
          %v820 = vmax.f32 %v756, %v788
          %v821 = vmax.f32 %v757, %v789
          %v822 = vmax.f32 %v758, %v790
          %v823 = vmax.f32 %v759, %v791
          %v824 = vmax.f32 %v760, %v792
          %v825 = vmax.f32 %v761, %v793
          %v826 = vmax.f32 %v762, %v794
          %v827 = vmax.f32 %v763, %v795
          %v828 = vmax.f32 %v764, %v796
          %v829 = vmax.f32 %v765, %v797
          %v830 = vmax.f32 %v766, %v798
          %v831 = vmax.f32 %v767, %v799
          %v832 = vmax.f32 %v768, %v800
          %v833 = vmax.f32 %v769, %v801
          %v834 = vmax.f32 %v770, %v802
          %v835 = vmax.f32 %v771, %v803
          %v836 = vmax.f32 %v772, %v804
          %v837 = vmax.f32 %v773, %v805
          %v838 = vmax.f32 %v774, %v806
          %v839 = vmax.f32 %v775, %v807
          %v840 = vmax.f32 %v776, %v808
          %v841 = vmax.f32 %v777, %v809
          %v842 = vmax.f32 %v778, %v810
          %v843 = vmax.f32 %v779, %v811
          %v844 = vmax.f32 %v780, %v812
          %v845 = vmax.f32 %v781, %v813
          %v846 = vmax.f32 %v782, %v814
          %v847 = vmax.f32 %v783, %v815
          %v848 = vmax.f32 %v784, %v816
          %849 = vst [vmem:[%s207] sm:$0xff] %v817
          %850 = vst [vmem:[%s207 + $0x8] sm:$0xff] %v818
          %851 = vst [vmem:[%s207 + $0x10] sm:$0xff] %v819
          %852 = vst [vmem:[%s207 + $0x18] sm:$0xff] %v820
          %853 = vst [vmem:[%s207 + $0x20] sm:$0xff] %v821
          %854 = vst [vmem:[%s207 + $0x28] sm:$0xff] %v822
          %855 = vst [vmem:[%s207 + $0x30] sm:$0xff] %v823
          %856 = vst [vmem:[%s207 + $0x38] sm:$0xff] %v824
          %857 = vst [vmem:[%s207 + $0x40] sm:$0xff] %v825
          %858 = vst [vmem:[%s207 + $0x48] sm:$0xff] %v826
          %859 = vst [vmem:[%s207 + $0x50] sm:$0xff] %v827
          %860 = vst [vmem:[%s207 + $0x58] sm:$0xff] %v828
          %861 = vst [vmem:[%s207 + $0x60] sm:$0xff] %v829
          %862 = vst [vmem:[%s207 + $0x68] sm:$0xff] %v830
          %863 = vst [vmem:[%s207 + $0x70] sm:$0xff] %v831
          %864 = vst [vmem:[%s207 + $0x78] sm:$0xff] %v832
          %865 = vst [vmem:[%s207 + $0x80] sm:$0xff] %v833
          %866 = vst [vmem:[%s207 + $0x88] sm:$0xff] %v834
          %867 = vst [vmem:[%s207 + $0x90] sm:$0xff] %v835
          %868 = vst [vmem:[%s207 + $0x98] sm:$0xff] %v836
          %869 = vst [vmem:[%s207 + $0xa0] sm:$0xff] %v837
          %870 = vst [vmem:[%s207 + $0xa8] sm:$0xff] %v838
          %871 = vst [vmem:[%s207 + $0xb0] sm:$0xff] %v839
          %872 = vst [vmem:[%s207 + $0xb8] sm:$0xff] %v840
          %873 = vst [vmem:[%s207 + $0xc0] sm:$0xff] %v841
          %874 = vst [vmem:[%s207 + $0xc8] sm:$0xff] %v842
          %875 = vst [vmem:[%s207 + $0xd0] sm:$0xff] %v843
          %876 = vst [vmem:[%s207 + $0xd8] sm:$0xff] %v844
          %877 = vst [vmem:[%s207 + $0xe0] sm:$0xff] %v845
          %878 = vst [vmem:[%s207 + $0xe8] sm:$0xff] %v846
          %879 = vst [vmem:[%s207 + $0xf0] sm:$0xff] %v847
          %880 = vst [vmem:[%s207 + $0xf8] sm:$0xff] %v848
        $region44: #{conv_block.1} parent=31 // pred_fallthru
          _
        %s881 = sand.u32 %s122, 1
        %s882 = scalar_lea.sflag [#allocation6], %s881
        %s883 = sand.u32 %s122, 1
        %s884 = smul.addr %s883, 256
        %s885 = scalar_lea.vmem [#allocation5], %s884
        // Predicated region
        $region45: #{conv_block.1} parent=31 // pred_check
          %p886 = pneg %p132
        $region46: #{conv_block.1} parent=31 // pred_check_branch
          %888 = sbr.rel (%p886) target = $region48
        $region47: #{conv_block.1} parent=31 // pred_region
          %s889 = smul.u32 %s23, %s24
          %s890 = smul.u32 32, %s889
          %892 = vsyncadd %s882, 0
          %s893 = smul.addr %s22, 32
          %s894 = sadd.s32 %s890, %s893
          %s895 = smul.addr %s894, 8
          %s896 = scalar_lea.hbm %s3, %s895
          %s897 = sshll.u32 %s885, 4
          %s898 = int_to_ptr.vmem [resolvable:$true] %s897
          %s899 = sshll.u32 %s896, 4
          %s900 = int_to_ptr.hbm [resolvable:$true] %s899
          %905 = dma.vmem_to_hbm [thread:$0]  %s898, 4096, %s900, %s882, 128, 128, 8
        $region48: #{conv_block.1} parent=31 // pred_fallthru
          _
      $region32: #{conv_block.1} parent=5 // pred_fallthru
        _
      %p906 = scmp.le.s32.totalorder 2, %s12
      // Predicated region
      $region49: #{conv_block.1} parent=5 // pred_check
        %p907 = pneg %p906
      $region50: #{conv_block.1} parent=5 // pred_check_branch
        %909 = sbr.rel (%p907) target = $region52
      $region51: #{conv_block.1} parent=5 // pred_region
        %s910 = ssub.s32 %s12, 2
        // Predicated region
        $region53: #{conv_block.1} parent=51 // pred_check
          %p911 = pneg %p138
        $region54: #{conv_block.1} parent=51 // pred_check_branch
          %913 = sbr.rel (%p911) target = $region56
        $region55: #{conv_block.1} parent=51 // pred_region
          %s914 = sand.u32 %s123, 1
          %s915 = scalar_lea.sflag [#allocation6], %s914
          %s916 = sand.u32 %s123, 1
          %s917 = smul.addr %s916, 256
          %s918 = scalar_lea.vmem [#allocation5], %s917
          %920 = dma.done %s915, 4096
        $region56: #{conv_block.1} parent=51 // pred_fallthru
          _
      $region52: #{conv_block.1} parent=5 // pred_fallthru
        _
    $region6: #{conv_block.1} parent=1 // loop_footer
      %s16 = sadd.s32 1, %s12
    $region7: #{conv_block.1} parent=1 // loop_footer_branch
      %11 = sbr.rel target = $region3
    $region8: #{conv_block.1} parent=1 // loop_exit
      _
    %921 = vsyncpa [#allocation6], 1
    %s922 = scalar_lea.sflag [#allocation6], 1
    %923 = vsyncpa %s922, 1

</llo_original>
